<compile_context>
chip_gen: v7x
topology: tpu7x:2x2x1
jax: 0.10.0
libtpu: 0.0.40
codegen_flags: <defaults>
</compile_context>

<pallas_src>
import jax
import jax.numpy as jnp
import numpy as np
from jax.experimental import pallas as pl
from jax.experimental.pallas import tpu as pltpu

BN_EPS = 1e-5


def _fused_kernel(patch_ref, mask_ref, w_ref, bias_ref, fcw_ref, out_ref, acc_ref):
    t = pl.program_id(1)
    nt = pl.num_programs(1)

    # Conv2d(3, 32, 3, stride=2, pad=1, bias=False) as an MXU matmul.
    # BN scale already folded into w_ref; K padded 27 -> 32; spatial lane-dense.
    conv = jnp.dot(w_ref[...], patch_ref[...],
                   preferred_element_type=jnp.float32)                # (32, T) f32
    # Folded-BN bias + ReLU6.
    act = jnp.clip(conv + bias_ref[...], 0.0, 6.0)

    # AdaptiveAvgPool2d(1): masked mean via matmul against a precomputed column
    # holding 1/M for valid spatial positions and 0 for padded tail columns, so
    # the reduction rides the (otherwise idle) MXU instead of the XLU.
    pooled = jnp.dot(act, mask_ref[...],
                     preferred_element_type=jnp.float32)              # (32, 1)

    @pl.when(t == 0)
    def _():
        acc_ref[...] = jnp.zeros_like(acc_ref)

    acc_ref[...] += pooled

    @pl.when(t == nt - 1)
    def _():
        # Linear(32, 2); the fc bias is added by the wrapper after the
        # per-parallel-slice partial sums are combined.
        out_ref[...] = jnp.dot(fcw_ref[...], acc_ref[...],
                               preferred_element_type=jnp.float32)[None]  # (1,2,1)


def _im2col_T(x_nchw, oh, ow):
    """(1, Cin, H, W) -> (9*Cin, OH*OW); rows ordered (kh, kw, cin), cols raster."""
    _, cin, _, _ = x_nchw.shape
    xp = jnp.pad(x_nchw, ((0, 0), (0, 0), (1, 1), (1, 1)))
    taps = []
    for kh in range(3):
        for kw in range(3):
            taps.append(xp[:, :, kh:kh + 2 * oh:2, kw:kw + 2 * ow:2])  # (1,Cin,OH,OW)
    pt = jnp.stack(taps, axis=1)                                       # (1,9,Cin,OH,OW)
    return pt.reshape(9 * cin, oh * ow)


def mobilenet_forward(x, params, *, max_tile_m=512, n_parallel=2):
    """x: (1, 3, H, W) float32 NCHW. Returns logits (1, 2)."""
    n, _, h, w = x.shape
    assert n == 1, "forward assumes batch == 1 (x.view((1, -1)) -> Linear(32, 2))"
    # Matches PyTorch Conv2d(stride=2, pad=1) output size for even AND odd H, W.
    oh, ow = (h + 1) // 2, (w + 1) // 2
    m = oh * ow
    cout = params["conv_w"].shape[0]
    n_classes = params["fc_w"].shape[0]

    # im2col, transposed so the spatial dim is the lane-dense last axis.
    patches = _im2col_T(x, oh, ow)                                     # (27, M) f32

    # Fold BatchNorm (eval mode, running stats) into conv weight / bias.
    scale = params["bn_gamma"] / jnp.sqrt(params["bn_var"] + BN_EPS)   # (32,)
    bias = params["bn_beta"] - params["bn_mean"] * scale               # (32,)
    w_mat = jnp.transpose(params["conv_w"], (0, 2, 3, 1)).reshape(cout, -1)
    w_mat = w_mat * scale[:, None]                                     # (32, 27)

    # Pad contraction dim to a sublane-aligned 32.
    k = w_mat.shape[1]
    k_pad = ((k + 7) // 8) * 8

    # Adaptive spatial tile: per-parallel-slice extent rounded up to a multiple
    # of 128 lanes, capped at max_tile_m (keeps padding waste AND per-grid-step
    # overhead small for both tiny and large images).
    m_slice = -(-m // n_parallel)
    tile_m = min(max_tile_m, ((m_slice + 127) // 128) * 128)
    nt = -(-m_slice // tile_m)
    m_pad = n_parallel * nt * tile_m

    patches = jnp.pad(patches, ((0, k_pad - k), (0, m_pad - m))).astype(jnp.bfloat16)
    w_mat = jnp.pad(w_mat, ((0, 0), (0, k_pad - k))).astype(jnp.bfloat16)
    bias_col = bias[:, None].astype(jnp.float32)                       # (32, 1)
    fcw = params["fc_w"].astype(jnp.float32)                           # (2, 32)

    # Pooling mask column: 1/M for valid spatial columns, 0 for padded tail.
    mask = ((jnp.arange(m_pad) < m).astype(jnp.float32) / float(m))[:, None]

    partial_logits = pl.pallas_call(
        _fused_kernel,
        out_shape=jax.ShapeDtypeStruct((n_parallel, n_classes, 1), jnp.float32),
        grid_spec=pltpu.PrefetchScalarGridSpec(
            num_scalar_prefetch=0,
            grid=(n_parallel, nt),
            in_specs=[
                pl.BlockSpec((k_pad, tile_m), lambda p, t: (0, p * nt + t)),
                pl.BlockSpec((tile_m, 1), lambda p, t: (p * nt + t, 0)),
                pl.BlockSpec((cout, k_pad), lambda p, t: (0, 0)),
                pl.BlockSpec((cout, 1), lambda p, t: (0, 0)),
                pl.BlockSpec((n_classes, cout), lambda p, t: (0, 0)),
            ],
            out_specs=pl.BlockSpec((1, n_classes, 1), lambda p, t: (p, 0, 0)),
            scratch_shapes=[pltpu.VMEM((cout, 1), jnp.float32)],
        ),
        compiler_params=pltpu.CompilerParams(
            dimension_semantics=("parallel", "arbitrary")),
    )(patches, mask, w_mat, bias_col, fcw)

    # Combine the parallel partial pooled contributions, add the fc bias.
    logits = partial_logits.sum(axis=0).reshape(1, -1) + params["fc_b"][None, :]
    return logits


def reference_forward(x, params):
    """Pure-JAX f32 reference matching the PyTorch forward."""
    y = jax.lax.conv_general_dilated(
        x, params["conv_w"], window_strides=(2, 2),
        padding=((1, 1), (1, 1)),
        dimension_numbers=("NCHW", "OIHW", "NCHW"))
    g = params["bn_gamma"][None, :, None, None]
    b = params["bn_beta"][None, :, None, None]
    mu = params["bn_mean"][None, :, None, None]
    var = params["bn_var"][None, :, None, None]
    y = (y - mu) / jnp.sqrt(var + BN_EPS) * g + b
    y = jnp.clip(y, 0.0, 6.0)
    pooled = jnp.mean(y, axis=(2, 3)).reshape(1, -1)                   # (1, 32)
    return pooled @ params["fc_w"].T + params["fc_b"][None, :]


def make_params(key):
    ks = jax.random.split(key, 6)
    return {
        "conv_w": jax.random.normal(ks[0], (32, 3, 3, 3), jnp.float32) * 0.1,
        "bn_gamma": 1.0 + 0.1 * jax.random.normal(ks[1], (32,), jnp.float32),
        "bn_beta": 0.1 * jax.random.normal(ks[2], (32,), jnp.float32),
        "bn_mean": 0.1 * jax.random.normal(ks[3], (32,), jnp.float32),
        "bn_var": jnp.abs(jax.random.normal(ks[4], (32,), jnp.float32)) + 0.5,
        "fc_w": jax.random.normal(ks[5], (2, 32), jnp.float32) * 0.1,
        "fc_b": jnp.asarray([0.01, -0.02], jnp.float32),
    }


if __name__ == "__main__":
    key = jax.random.PRNGKey(0)
    k_params, k_x = jax.random.split(key)
    params = make_params(k_params)
    # forward assumes batch == 1 (x.view((1, -1)) feeding Linear(32, 2)).
    x = jax.random.normal(k_x, (1, 3, 32, 32), jnp.float32)

    logits = jax.block_until_ready(jax.jit(mobilenet_forward)(x, params))
    ref = jax.block_until_ready(reference_forward(x, params))

    assert logits.shape == (1, 2), logits.shape
    # bf16 conv operands -> loosened tolerance vs the f32 reference.
    np.testing.assert_allclose(np.asarray(logits), np.asarray(ref),
                               rtol=2e-2, atol=2e-2)
    print("KERNEL_OK")
</pallas_src>

<mosaic_0001>
module attributes {stable_mosaic.version = 11 : i64} {
  func.func @_fused_kernel(%arg0: i32, %arg1: i32, %arg2: memref<32x128xbf16, #tpu.memory_space<vmem>>, %arg3: memref<128x1xf32, #tpu.memory_space<vmem>>, %arg4: memref<32x32xbf16, #tpu.memory_space<vmem>>, %arg5: memref<32x1xf32, #tpu.memory_space<vmem>>, %arg6: memref<2x32xf32, #tpu.memory_space<vmem>>, %arg7: memref<1x2x1xf32, #tpu.memory_space<vmem>>, %arg8: memref<32x1xf32, #tpu.memory_space<vmem>>) attributes {dimension_semantics = [#tpu.dimension_semantics<parallel>, #tpu.dimension_semantics<arbitrary>], iteration_bounds = array<i64: 2, 1>, scalar_prefetch = 0 : i64, scratch_operands = 1 : i64, tpu.core_type = #tpu.core_type<tc>, window_params = [{transform_indices = @transform_0, window_bounds = array<i64: 32, 128>}, {transform_indices = @transform_1, window_bounds = array<i64: 128, 1>}, {pipeline_mode = #tpu.pipeline_mode<synchronous>, transform_indices = @transform_2, window_bounds = array<i64: 32, 32>}, {pipeline_mode = #tpu.pipeline_mode<synchronous>, transform_indices = @transform_3, window_bounds = array<i64: 32, 1>}, {pipeline_mode = #tpu.pipeline_mode<synchronous>, transform_indices = @transform_4, window_bounds = array<i64: 2, 32>}, {transform_indices = @transform_5, window_bounds = array<i64: 1, 2, 1>}]} {
    %c0 = arith.constant 0 : index
    %c0_0 = arith.constant 0 : index
    %0 = vector.load %arg4[%c0, %c0_0] : memref<32x32xbf16, #tpu.memory_space<vmem>>, vector<32x32xbf16>
    %c0_1 = arith.constant 0 : index
    %c0_2 = arith.constant 0 : index
    %1 = vector.load %arg2[%c0_1, %c0_2] : memref<32x128xbf16, #tpu.memory_space<vmem>>, vector<32x128xbf16>
    %cst = arith.constant dense<0.000000e+00> : vector<32x128xf32>
    %2 = tpu.matmul %0, %1, %cst {dimension_numbers = #tpu.dot_dimension_numbers<[1], [0], [0], [1], [0, 0, 1, 1], [], []>} : vector<32x32xbf16>, vector<32x128xbf16>, vector<32x128xf32> -> vector<32x128xf32>
    %c0_3 = arith.constant 0 : index
    %c0_4 = arith.constant 0 : index
    %3 = vector.load %arg5[%c0_3, %c0_4] : memref<32x1xf32, #tpu.memory_space<vmem>>, vector<32x1xf32>
    %4 = vector.broadcast %3 : vector<32x1xf32> to vector<32x128xf32>
    %5 = arith.addf %2, %4 : vector<32x128xf32>
    %cst_5 = arith.constant 0.000000e+00 : f32
    %cst_6 = arith.constant 6.000000e+00 : f32
    %6 = vector.broadcast %cst_5 : f32 to vector<32x128xf32>
    %7 = arith.maximumf %6, %5 : vector<32x128xf32>
    %8 = vector.broadcast %cst_6 : f32 to vector<32x128xf32>
    %9 = arith.minimumf %8, %7 : vector<32x128xf32>
    %c0_7 = arith.constant 0 : index
    %c0_8 = arith.constant 0 : index
    %10 = vector.load %arg3[%c0_7, %c0_8] : memref<128x1xf32, #tpu.memory_space<vmem>>, vector<128x1xf32>
    %cst_9 = arith.constant dense<0.000000e+00> : vector<32x1xf32>
    %11 = tpu.matmul %9, %10, %cst_9 {dimension_numbers = #tpu.dot_dimension_numbers<[1], [0], [0], [1], [0, 0, 1, 1], [], []>} : vector<32x128xf32>, vector<128x1xf32>, vector<32x1xf32> -> vector<32x1xf32>
    %c0_i32 = arith.constant 0 : i32
    %12 = arith.cmpi eq, %arg1, %c0_i32 : i32
    %13 = arith.extui %12 : i1 to i32
    %c0_i32_10 = arith.constant 0 : i32
    %14 = arith.cmpi ne, %13, %c0_i32_10 : i32
    scf.if %14 {
      %cst_17 = arith.constant 0.000000e+00 : f32
      %21 = vector.broadcast %cst_17 : f32 to vector<32x1xf32>
      %c0_18 = arith.constant 0 : index
      %c0_19 = arith.constant 0 : index
      %22 = vector.load %arg8[%c0_18, %c0_19] : memref<32x1xf32, #tpu.memory_space<vmem>>, vector<32x1xf32>
      tpu.vector_store %arg8[%c0_18, %c0_19], %21 {strides = array<i32>} : memref<32x1xf32, #tpu.memory_space<vmem>>, vector<32x1xf32>,
    } else {
    }
    %c0_11 = arith.constant 0 : index
    %c0_12 = arith.constant 0 : index
    %15 = vector.load %arg8[%c0_11, %c0_12] : memref<32x1xf32, #tpu.memory_space<vmem>>, vector<32x1xf32>
    %16 = arith.addf %15, %11 : vector<32x1xf32>
    %c0_13 = arith.constant 0 : index
    %c0_14 = arith.constant 0 : index
    %17 = vector.load %arg8[%c0_13, %c0_14] : memref<32x1xf32, #tpu.memory_space<vmem>>, vector<32x1xf32>
    tpu.vector_store %arg8[%c0_13, %c0_14], %16 {strides = array<i32>} : memref<32x1xf32, #tpu.memory_space<vmem>>, vector<32x1xf32>,
    %c0_i32_15 = arith.constant 0 : i32
    %18 = arith.cmpi eq, %arg1, %c0_i32_15 : i32
    %19 = arith.extui %18 : i1 to i32
    %c0_i32_16 = arith.constant 0 : i32
    %20 = arith.cmpi ne, %19, %c0_i32_16 : i32
    scf.if %20 {
      %c0_17 = arith.constant 0 : index
      %c0_18 = arith.constant 0 : index
      %21 = vector.load %arg6[%c0_17, %c0_18] : memref<2x32xf32, #tpu.memory_space<vmem>>, vector<2x32xf32>
      %c0_19 = arith.constant 0 : index
      %c0_20 = arith.constant 0 : index
      %22 = vector.load %arg8[%c0_19, %c0_20] : memref<32x1xf32, #tpu.memory_space<vmem>>, vector<32x1xf32>
      %cst_21 = arith.constant dense<0.000000e+00> : vector<2x1xf32>
      %23 = tpu.matmul %21, %22, %cst_21 {dimension_numbers = #tpu.dot_dimension_numbers<[1], [0], [0], [1], [0, 0, 1, 1], [], []>} : vector<2x32xf32>, vector<32x1xf32>, vector<2x1xf32> -> vector<2x1xf32>
      %24 = vector.shape_cast %23 : vector<2x1xf32> to vector<1x2x1xf32>
      %c0_22 = arith.constant 0 : index
      %c0_23 = arith.constant 0 : index
      %c0_24 = arith.constant 0 : index
      %25 = vector.load %arg7[%c0_22, %c0_23, %c0_24] : memref<1x2x1xf32, #tpu.memory_space<vmem>>, vector<1x2x1xf32>
      tpu.vector_store %arg7[%c0_22, %c0_23, %c0_24], %24 {strides = array<i32>} : memref<1x2x1xf32, #tpu.memory_space<vmem>>, vector<1x2x1xf32>,
    } else {
    }
    return
  }
  func.func @transform_0(%arg0: i32, %arg1: i32) -> (i32, i32) {
    %c1_i32 = arith.constant 1 : i32
    %0 = arith.muli %arg0, %c1_i32 : i32
    %1 = arith.addi %0, %arg1 : i32
    %c0_i32 = arith.constant 0 : i32
    %c0_i32_0 = arith.constant 0 : i32
    return %c0_i32, %1 : i32, i32
  }
  func.func @transform_1(%arg0: i32, %arg1: i32) -> (i32, i32) {
    %c1_i32 = arith.constant 1 : i32
    %0 = arith.muli %arg0, %c1_i32 : i32
    %1 = arith.addi %0, %arg1 : i32
    %c0_i32 = arith.constant 0 : i32
    %c0_i32_0 = arith.constant 0 : i32
    return %1, %c0_i32 : i32, i32
  }
  func.func @transform_2(%arg0: i32, %arg1: i32) -> (i32, i32) {
    %c0_i32 = arith.constant 0 : i32
    %c0_i32_0 = arith.constant 0 : i32
    %c0_i32_1 = arith.constant 0 : i32
    return %c0_i32, %c0_i32_0 : i32, i32
  }
  func.func @transform_3(%arg0: i32, %arg1: i32) -> (i32, i32) {
    %c0_i32 = arith.constant 0 : i32
    %c0_i32_0 = arith.constant 0 : i32
    %c0_i32_1 = arith.constant 0 : i32
    return %c0_i32, %c0_i32_0 : i32, i32
  }
  func.func @transform_4(%arg0: i32, %arg1: i32) -> (i32, i32) {
    %c0_i32 = arith.constant 0 : i32
    %c0_i32_0 = arith.constant 0 : i32
    %c0_i32_1 = arith.constant 0 : i32
    return %c0_i32, %c0_i32_0 : i32, i32
  }
  func.func @transform_5(%arg0: i32, %arg1: i32) -> (i32, i32, i32) {
    %c0_i32 = arith.constant 0 : i32
    %c0_i32_0 = arith.constant 0 : i32
    %c0_i32_1 = arith.constant 0 : i32
    return %arg0, %c0_i32, %c0_i32_0 : i32, i32, i32
  }
}

</mosaic_0001>

<llo_original>
// kernel: mobilenet_forward.1
$region0: #{mobilenet_forward.1}
  #allocation0 [shape = 'u32[]', space=smem, size = 0x4, offset = 0x4, fixed_abs, tag = 'smem constant byte address 0x4 - core index']
  #allocation1 [shape = 'u32[144,128]{1,0:T(1,128)}', space=vmem, size = 0x12000, scoped, tag = 'internal scratch']
  #allocation2 [shape = 'f32[32,1]{1,0:T(8,128)}', space=vmem, size = 0x4000, scoped, tag = 'scratch operand']
  %s0 = inlined_call_operand.vmem [shape: bf16[32,256], index: 0, kind: input, shape index: {}]
  %s1 = inlined_call_operand.vmem [shape: f32[256,1], index: 1, kind: input, shape index: {}]
  %s2 = inlined_call_operand.vmem [shape: bf16[32,32], index: 2, kind: input, shape index: {}]
  %s3 = inlined_call_operand.vmem [shape: f32[32,1], index: 3, kind: input, shape index: {}]
  %s4 = inlined_call_operand.vmem [shape: f32[2,32], index: 4, kind: input, shape index: {}]
  %s5 = inlined_call_operand.vmem [shape: f32[2,2,1], index: 5, kind: output, shape index: {}]
  %s6 = sld [smem:[#allocation0]]
  $region102: #{mobilenet_forward.1} parent=0
    _
  %s8 = ssub.s32 1, %s6
  %s9 = scalar_select 0, %s8, %s6
  $region1: #{mobilenet_forward.1} parent=0
    #allocation3 [shape = 'u8[16384]{0}', space=vmem, size = 0x4000, scoped, tag = 'input window, operand 0']
    loop: start=0, step=1, limit=4
    $region2: #{mobilenet_forward.1} parent=1 // loop_pre_header
      _
    $region3: #{mobilenet_forward.1} parent=1 // loop_header
      %s11 = sphi 0, %s15
      %p12 = scmp.ge.s32.totalorder %s11, 4
      %s18 = sphi 0, %s30
      %s19 = sphi 0, %s26
      %s20 = sphi 0, %s18
      %s21 = sphi 0, %s19
      %s22 = sphi 0, %s20
      %s23 = sphi 0, %s21
      %s35 = sphi 0, %s37
      %s38 = sphi 0, %s35
      %s39 = sphi 0, %s38
      %s55 = sphi 0, %s39
      %s63 = sphi 0, %s65
      %s66 = sphi 0, %s63
      %s67 = sphi 0, %s66
      %s83 = sphi 0, %s67
      %s87 = sphi 0, %s87
      %s89 = sphi 0, %s87
      %s90 = sphi 0, %s89
      %s104 = sphi 0, %s90
      %s108 = sphi 0, %s108
      %s110 = sphi 0, %s108
      %s111 = sphi 0, %s110
      %s125 = sphi 0, %s111
      %s129 = sphi 0, %s129
      %s131 = sphi 0, %s129
      %s132 = sphi 0, %s131
      %s146 = sphi 0, %s132
      %s152 = sphi 0, %s154
      %s155 = sphi 0, %s152
      %s156 = sphi 0, %s155
      %s172 = sphi 0, %s156
    $region4: #{mobilenet_forward.1} parent=1 // loop_header_branch
      %14 = sbr.rel (%p12) target = $region8
    $region5: #{mobilenet_forward.1} parent=1 // loop_body
      %s16 = ssub.s32 %s11, 1
      %s17 = ssub.s32 %s11, 2
      %s24 = sadd.s32 1, %s19
      %p25 = scmp.ge.s32.totalorder %s24, 1
      %s26 = scalar_select %p25, 0, %s24
      %s27 = sadd.s32 1, %s18
      %s28 = scalar_select %p25, %s27, %s18
      %p29 = scmp.ge.s32.totalorder %s28, 2
      %s30 = scalar_select %p29, 0, %s28
      %s31 = sadd.s32 %s18, %s19
      %s32 = sadd.s32 %s30, %s26
      %s33 = ssub.s32 %s31, %s32
      %p34 = scmp.eq.s32.totalorder %s33, 0
      %s36 = sadd.s32 %s35, 1
      %s37 = scalar_select %p34, %s35, %s36
      %p40 = pneg %p34
      %p41 = scmp.eq.s32.totalorder %s11, 1
      %p42 = por %p40, %p41
      %p43 = scmp.ne.s32.totalorder %s35, %s38
      %p44 = scmp.eq.s32.totalorder %s11, 0
      %p45 = por %p43, %p44
      %p46 = scmp.ne.s32.totalorder %s35, %s38
      %p47 = scmp.eq.s32.totalorder %s16, 1
      %p48 = por %p46, %p47
      %p49 = scmp.ne.s32.totalorder %s38, %s39
      %p50 = scmp.eq.s32.totalorder %s16, 0
      %p51 = por %p49, %p50
      %p52 = scmp.ne.s32.totalorder %s38, %s39
      %p53 = scmp.eq.s32.totalorder %s17, 1
      %p54 = por %p52, %p53
      %p56 = scmp.ne.s32.totalorder %s39, %s55
      %p57 = scmp.eq.s32.totalorder %s17, 0
      %p58 = por %p56, %p57
      %s59 = sadd.s32 %s18, %s19
      %s60 = sadd.s32 %s30, %s26
      %s61 = ssub.s32 %s59, %s60
      %p62 = scmp.eq.s32.totalorder %s61, 0
      %s64 = sadd.s32 %s63, 1
      %s65 = scalar_select %p62, %s63, %s64
      %p68 = pneg %p62
      %p69 = scmp.eq.s32.totalorder %s11, 1
      %p70 = por %p68, %p69
      %p71 = scmp.ne.s32.totalorder %s63, %s66
      %p72 = scmp.eq.s32.totalorder %s11, 0
      %p73 = por %p71, %p72
      %p74 = scmp.ne.s32.totalorder %s63, %s66
      %p75 = scmp.eq.s32.totalorder %s16, 1
      %p76 = por %p74, %p75
      %p77 = scmp.ne.s32.totalorder %s66, %s67
      %p78 = scmp.eq.s32.totalorder %s16, 0
      %p79 = por %p77, %p78
      %p80 = scmp.ne.s32.totalorder %s66, %s67
      %p81 = scmp.eq.s32.totalorder %s17, 1
      %p82 = por %p80, %p81
      %p84 = scmp.ne.s32.totalorder %s67, %s83
      %p85 = scmp.eq.s32.totalorder %s17, 0
      %p86 = por %p84, %p85
      %s88 = sadd.s32 %s87, 1
      %p91 = scmp.eq.s32.totalorder %s11, 1
      %p92 = scmp.ne.s32.totalorder %s87, %s89
      %p93 = scmp.eq.s32.totalorder %s11, 0
      %p94 = por %p92, %p93
      %p95 = scmp.ne.s32.totalorder %s87, %s89
      %p96 = scmp.eq.s32.totalorder %s16, 1
      %p97 = por %p95, %p96
      %p98 = scmp.ne.s32.totalorder %s89, %s90
      %p99 = scmp.eq.s32.totalorder %s16, 0
      %p100 = por %p98, %p99
      %p101 = scmp.ne.s32.totalorder %s89, %s90
      %p102 = scmp.eq.s32.totalorder %s17, 1
      %p103 = por %p101, %p102
      %p105 = scmp.ne.s32.totalorder %s90, %s104
      %p106 = scmp.eq.s32.totalorder %s17, 0
      %p107 = por %p105, %p106
      %s109 = sadd.s32 %s108, 1
      %p112 = scmp.eq.s32.totalorder %s11, 1
      %p113 = scmp.ne.s32.totalorder %s108, %s110
      %p114 = scmp.eq.s32.totalorder %s11, 0
      %p115 = por %p113, %p114
      %p116 = scmp.ne.s32.totalorder %s108, %s110
      %p117 = scmp.eq.s32.totalorder %s16, 1
      %p118 = por %p116, %p117
      %p119 = scmp.ne.s32.totalorder %s110, %s111
      %p120 = scmp.eq.s32.totalorder %s16, 0
      %p121 = por %p119, %p120
      %p122 = scmp.ne.s32.totalorder %s110, %s111
      %p123 = scmp.eq.s32.totalorder %s17, 1
      %p124 = por %p122, %p123
      %p126 = scmp.ne.s32.totalorder %s111, %s125
      %p127 = scmp.eq.s32.totalorder %s17, 0
      %p128 = por %p126, %p127
      %s130 = sadd.s32 %s129, 1
      %p133 = scmp.eq.s32.totalorder %s11, 1
      %p134 = scmp.ne.s32.totalorder %s129, %s131
      %p135 = scmp.eq.s32.totalorder %s11, 0
      %p136 = por %p134, %p135
      %p137 = scmp.ne.s32.totalorder %s129, %s131
      %p138 = scmp.eq.s32.totalorder %s16, 1
      %p139 = por %p137, %p138
      %p140 = scmp.ne.s32.totalorder %s131, %s132
      %p141 = scmp.eq.s32.totalorder %s16, 0
      %p142 = por %p140, %p141
      %p143 = scmp.ne.s32.totalorder %s131, %s132
      %p144 = scmp.eq.s32.totalorder %s17, 1
      %p145 = por %p143, %p144
      %p147 = scmp.ne.s32.totalorder %s132, %s146
      %p148 = scmp.eq.s32.totalorder %s17, 0
      %p149 = por %p147, %p148
      %s150 = ssub.s32 %s18, %s30
      %p151 = scmp.eq.s32.totalorder %s150, 0
      %s153 = sadd.s32 %s152, 1
      %s154 = scalar_select %p151, %s152, %s153
      %p157 = pneg %p151
      %p158 = scmp.eq.s32.totalorder %s11, 1
      %p159 = por %p157, %p158
      %p160 = scmp.ne.s32.totalorder %s152, %s155
      %p161 = scmp.eq.s32.totalorder %s11, 0
      %p162 = por %p160, %p161
      %p163 = scmp.ne.s32.totalorder %s152, %s155
      %p164 = scmp.eq.s32.totalorder %s16, 1
      %p165 = por %p163, %p164
      %p166 = scmp.ne.s32.totalorder %s155, %s156
      %p167 = scmp.eq.s32.totalorder %s16, 0
      %p168 = por %p166, %p167
      %p169 = scmp.ne.s32.totalorder %s155, %s156
      %p170 = scmp.eq.s32.totalorder %s17, 1
      %p171 = por %p169, %p170
      %p173 = scmp.ne.s32.totalorder %s156, %s172
      %p174 = scmp.eq.s32.totalorder %s17, 0
      %p175 = por %p173, %p174
      %p176 = scmp.le.s32.totalorder 1, %s11
      %p177 = scmp.lt.s32.totalorder %s11, 3
      %p178 = pnand %p176, %p177
      %p179 = pneg %p178
      // Predicated region
      $region9: #{mobilenet_forward.1} parent=5 // pred_check
        _
      $region10: #{mobilenet_forward.1} parent=5 // pred_check_branch
        %181 = sbr.rel (%p178) target = $region12
      $region11: #{mobilenet_forward.1} parent=5 // pred_region
        %s182 = ssub.s32 %s11, 1
        // Predicated region
        $region13: #{mobilenet_forward.1} parent=11 // pred_check
          %p183 = pneg %p100
        $region14: #{mobilenet_forward.1} parent=11 // pred_check_branch
          %185 = sbr.rel (%p183) target = $region16
        $region15: #{mobilenet_forward.1} parent=11 // pred_region
          _
        $region16: #{mobilenet_forward.1} parent=11 // pred_fallthru
          _
        // Predicated region
        $region17: #{mobilenet_forward.1} parent=11 // pred_check
          %p186 = pneg %p121
        $region18: #{mobilenet_forward.1} parent=11 // pred_check_branch
          %188 = sbr.rel (%p186) target = $region20
        $region19: #{mobilenet_forward.1} parent=11 // pred_region
          _
        $region20: #{mobilenet_forward.1} parent=11 // pred_fallthru
          _
        // Predicated region
        $region21: #{mobilenet_forward.1} parent=11 // pred_check
          %p189 = pneg %p142
        $region22: #{mobilenet_forward.1} parent=11 // pred_check_branch
          %191 = sbr.rel (%p189) target = $region24
        $region23: #{mobilenet_forward.1} parent=11 // pred_region
          _
        $region24: #{mobilenet_forward.1} parent=11 // pred_fallthru
          _
      $region12: #{mobilenet_forward.1} parent=5 // pred_fallthru
        _
      %p192 = scmp.lt.s32.totalorder %s11, 2
      // Predicated region
      $region25: #{mobilenet_forward.1} parent=5 // pred_check
        %p193 = pneg %p192
      $region26: #{mobilenet_forward.1} parent=5 // pred_check_branch
        %195 = sbr.rel (%p193) target = $region28
      $region27: #{mobilenet_forward.1} parent=5 // pred_region
        // Predicated region
        $region29: #{mobilenet_forward.1} parent=27 // pred_check
          %p196 = pneg %p45
        $region30: #{mobilenet_forward.1} parent=27 // pred_check_branch
          %198 = sbr.rel (%p196) target = $region32
        $region31: #{mobilenet_forward.1} parent=27 // pred_region
          %s199 = sand.u32 %s35, 1
          %s200 = sand.u32 %s35, 1
          %s201 = smul.addr %s200, 16
          %s202 = scalar_lea.vmem [#allocation3], %s201
          %s203 = sadd.s32 %s18, %s19
          %s204 = smul.addr %s203, 4
          %s205 = scalar_lea.vmem %s0, %s204
          // Predicated region
          $region33: #{mobilenet_forward.1} parent=31 // pred_check
            _
          $region34: #{mobilenet_forward.1} parent=31 // pred_check_branch
            %207 = sbr.rel (0) target = $region36
          $region35: #{mobilenet_forward.1} parent=31 // pred_region
            // Predicated region
            $region37: #{mobilenet_forward.1} parent=35 // pred_check
              _
            $region38: #{mobilenet_forward.1} parent=35 // pred_check_branch
              %209 = sbr.rel target = $region40
            $region39: #{mobilenet_forward.1} parent=35 // pred_region
              // Predicated region
              $region52: #{mobilenet_forward.1} parent=39 // pred_check
                _
              $region53: #{mobilenet_forward.1} parent=39 // pred_check_branch
                %230 = sbr.rel (0) target = $region55
              $region54: #{mobilenet_forward.1} parent=39 // pred_region
                loop: start=0, step=1, limit=1
                $region56: #{mobilenet_forward.1} parent=54 // loop_pre_header
                  _
                $region57: #{mobilenet_forward.1} parent=54 // loop_header
                  %s232 = sphi 0, %s236
                  %p233 = scmp.ge.s32.totalorder %s232, 1
                  %s237 = sphi %s205, %s205
                  %s238 = sphi %s202, %s202
                $region58: #{mobilenet_forward.1} parent=54 // loop_header_branch
                  %235 = sbr.rel (%p233) target = $region62
                $region59: #{mobilenet_forward.1} parent=54 // loop_body
                  _
                $region60: #{mobilenet_forward.1} parent=54 // loop_footer
                  %s236 = sadd.s32 1, %s232
                $region61: #{mobilenet_forward.1} parent=54 // loop_footer_branch
                  %231 = sbr.rel target = $region57
                $region62: #{mobilenet_forward.1} parent=54 // loop_exit
                  _
                loop: start=0, step=1, limit=1
                $region63: #{mobilenet_forward.1} parent=54 // loop_pre_header
                  _
                $region64: #{mobilenet_forward.1} parent=54 // loop_header
                  %s241 = sphi 0, %s245
                  %p242 = scmp.ge.s32.totalorder %s241, 1
                  %s246 = sphi %s205, %s205
                  %s247 = sphi %s202, %s202
                $region65: #{mobilenet_forward.1} parent=54 // loop_header_branch
                  %244 = sbr.rel (%p242) target = $region69
                $region66: #{mobilenet_forward.1} parent=54 // loop_body
                  %v248 = vld [vmem:[%s246] sm:$0xf]
                  %249 = vst [vmem:[%s247] sm:$0xf] %v248
                  %v250 = vld [vmem:[%s246 + $0x8] sm:$0xf]
                  %251 = vst [vmem:[%s247 + $0x4] sm:$0xf] %v250
                  %v252 = vld [vmem:[%s246 + $0x10] sm:$0xf]
                  %253 = vst [vmem:[%s247 + $0x8] sm:$0xf] %v252
                  %v254 = vld [vmem:[%s246 + $0x18] sm:$0xf]
                  %255 = vst [vmem:[%s247 + $0xc] sm:$0xf] %v254
                $region67: #{mobilenet_forward.1} parent=54 // loop_footer
                  %s245 = sadd.s32 1, %s241
                $region68: #{mobilenet_forward.1} parent=54 // loop_footer_branch
                  %240 = sbr.rel target = $region64
                $region69: #{mobilenet_forward.1} parent=54 // loop_exit
                  _
              $region55: #{mobilenet_forward.1} parent=39 // pred_fallthru
                _
            $region40: #{mobilenet_forward.1} parent=35 // pred_fallthru
              _
            // Predicated region
            $region41: #{mobilenet_forward.1} parent=35 // pred_check
              _
            $region42: #{mobilenet_forward.1} parent=35 // pred_check_branch
              %211 = sbr.rel (0) target = $region44
            $region43: #{mobilenet_forward.1} parent=35 // pred_region
              loop: start=0, step=1, limit=1
              $region45: #{mobilenet_forward.1} parent=43 // loop_pre_header
                _
              $region46: #{mobilenet_forward.1} parent=43 // loop_header
                %s214 = sphi 0, %s218
                %p215 = scmp.ge.s32.totalorder %s214, 1
                %s219 = sphi %s205, %s205
                %s220 = sphi %s202, %s202
              $region47: #{mobilenet_forward.1} parent=43 // loop_header_branch
                %217 = sbr.rel (%p215) target = $region51
              $region48: #{mobilenet_forward.1} parent=43 // loop_body
                %v221 = vld [vmem:[%s219] sm:$0xf]
                %222 = vst [vmem:[%s220] sm:$0xf] %v221
                %v223 = vld [vmem:[%s219 + $0x8] sm:$0xf]
                %224 = vst [vmem:[%s220 + $0x4] sm:$0xf] %v223
                %v225 = vld [vmem:[%s219 + $0x10] sm:$0xf]
                %226 = vst [vmem:[%s220 + $0x8] sm:$0xf] %v225
                %v227 = vld [vmem:[%s219 + $0x18] sm:$0xf]
                %228 = vst [vmem:[%s220 + $0xc] sm:$0xf] %v227
              $region49: #{mobilenet_forward.1} parent=43 // loop_footer
                %s218 = sadd.s32 1, %s214
              $region50: #{mobilenet_forward.1} parent=43 // loop_footer_branch
                %213 = sbr.rel target = $region46
              $region51: #{mobilenet_forward.1} parent=43 // loop_exit
                _
            $region44: #{mobilenet_forward.1} parent=35 // pred_fallthru
              _
          $region36: #{mobilenet_forward.1} parent=31 // pred_fallthru
            _
          %256 = vnop
        $region32: #{mobilenet_forward.1} parent=27 // pred_fallthru
          _
        // Predicated region
        $region70: #{mobilenet_forward.1} parent=27 // pred_check
          %p257 = pneg %p73
        $region71: #{mobilenet_forward.1} parent=27 // pred_check_branch
          %259 = sbr.rel (%p257) target = $region73
        $region72: #{mobilenet_forward.1} parent=27 // pred_region
          %s260 = sadd.s32 %s18, %s19
          %s261 = smul.u32 16, %s260
          %p262 = scmp.lt.s32.totalorder %s261, 31
          %s263 = scalar_select %p262, %s261, 31
          %s264 = smul.addr %s263, 8
          %s265 = scalar_lea.vmem %s1, %s264
          %s266 = sadd.s32 %s18, %s19
          %s267 = smul.u32 16, %s266
        $region73: #{mobilenet_forward.1} parent=27 // pred_fallthru
          _
      $region28: #{mobilenet_forward.1} parent=5 // pred_fallthru
        _
      %p268 = scmp.le.s32.totalorder 1, %s11
      %p269 = scmp.lt.s32.totalorder %s11, 3
      %p270 = pnand %p268, %p269
      %p271 = pneg %p270
      // Predicated region
      $region74: #{mobilenet_forward.1} parent=5 // pred_check
        _
      $region75: #{mobilenet_forward.1} parent=5 // pred_check_branch
        %273 = sbr.rel (%p270) target = $region77
      $region76: #{mobilenet_forward.1} parent=5 // pred_region
        %s274 = ssub.s32 %s11, 1
        %s275 = sand.u32 %s38, 1
        %s276 = sand.u32 %s38, 1
        %s277 = smul.addr %s276, 16
        %s278 = scalar_lea.vmem [#allocation3], %s277
        // Predicated region
        $region78: #{mobilenet_forward.1} parent=76 // pred_check
          %p279 = pneg %p51
        $region79: #{mobilenet_forward.1} parent=76 // pred_check_branch
          %281 = sbr.rel (%p279) target = $region81
        $region80: #{mobilenet_forward.1} parent=76 // pred_region
          _
        $region81: #{mobilenet_forward.1} parent=76 // pred_fallthru
          _
        %s282 = sand.u32 %s38, 1
        %s283 = sand.u32 %s38, 1
        %s284 = smul.addr %s283, 16
        %s285 = scalar_lea.vmem [#allocation3], %s284
        %p286 = pneg %p51
        %p287 = pneg %p48
        %s288 = sadd.s32 %s20, %s21
        %s289 = smul.u32 16, %s288
        %p290 = scmp.lt.s32.totalorder %s289, 31
        %s291 = scalar_select %p290, %s289, 31
        %s292 = smul.addr %s291, 8
        %s293 = scalar_lea.vmem %s1, %s292
        %p294 = pneg %p79
        %p295 = pneg %p76
        %p296 = pneg %p100
        %p297 = pneg %p97
        %p298 = pneg %p121
        %p299 = pneg %p118
        %p300 = pneg %p142
        %p301 = pneg %p139
        %p302 = pneg %p168
        %p303 = pneg %p165
        %p304 = scmp.lt.s32.totalorder %s20, 1
        %s305 = scalar_select %p304, %s20, 1
        %s306 = smul.addr %s305, 2
        %s307 = scalar_lea.vmem %s5, %s306
        %s308 = sadd.s32 %s20, %s21
        %s309 = sadd.s32 %s20, %s21
        %s310 = smul.u32 16, %s309
        %p311 = scmp.lt.s32.totalorder %s310, 31
        %s312 = scalar_select %p311, %s310, 31
        %s313 = smul.addr %s312, 8
        %s314 = scalar_lea.vmem %s1, %s313
        %s315 = sadd.s32 %s20, %s21
        %s316 = smul.u32 16, %s315
        %p317 = scmp.lt.s32.totalorder %s20, 1
        %s318 = scalar_select %p317, %s20, 1
        %s319 = smul.addr %s318, 2
        %s320 = scalar_lea.vmem %s5, %s319
        %v322 = vld [vmem:[%s2] sm:$0xf]
        %v323 = vld [vmem:[%s2 + $0x4] sm:$0xf]
        %v324 = vld [vmem:[%s2 + $0x8] sm:$0xf]
        %v325 = vld [vmem:[%s2 + $0xc] sm:$0xf]
        %v326 = vld [vmem:[%s278] sm:$0xf]
        %v327 = vld [vmem:[%s278 + $0x4] sm:$0xf]
        %v328 = vld [vmem:[%s278 + $0x8] sm:$0xf]
        %v329 = vld [vmem:[%s278 + $0xc] sm:$0xf]
        %v330 = vld [vmem:[%s3] sm:$0xff]
        %v331 = vld [vmem:[%s3 + $0x8] sm:$0xff]
        %v332 = vld [vmem:[%s3 + $0x10] sm:$0xff]
        %v333 = vld [vmem:[%s3 + $0x18] sm:$0xff]
        %335 = vset.pattern.permute.xlu0 0
        %336 = vperm.xlu0 %335, %v330
        %v337 = vpop.permute.xlu0 %336
        %340 = vset.pattern.permute.xlu0 0
        %341 = vperm.xlu0 %340, %v331
        %v342 = vpop.permute.xlu0 %341
        %345 = vset.pattern.permute.xlu0 0
        %346 = vperm.xlu0 %345, %v332
        %v347 = vpop.permute.xlu0 %346
        %350 = vset.pattern.permute.xlu0 0
        %351 = vperm.xlu0 %350, %v333
        %v352 = vpop.permute.xlu0 %351
        %v358 = vunpack.c.l.b16 %v322
        %v359 = vunpack.c.l.b16 %v323
        %v360 = vunpack.c.l.b16 %v324
        %v361 = vunpack.c.l.b16 %v325
        %v362 = vpack.c.b16 %v359, %v358
        %v363 = vpack.c.b16 %v361, %v360
        %v368 = vunpack.c.l.b16 %v326
        %v369 = vunpack.c.l.b16 %v327
        %v370 = vunpack.c.l.b16 %v328
        %v371 = vunpack.c.l.b16 %v329
        %v372 = vpack.c.b16 %v369, %v368
        %v373 = vpack.c.b16 %v371, %v370
        %vm376 = vcmask 261120
        %v378 = vsel %vm376, %v362, 0
        %v381 = vsel %vm376, %v363, 0
        %383 = vmatprep.subr.bf16.mxu0 0
        %384 = vmatpush1.bf16.msra.mxu0 %v372
        %385 = vmatprep.subr.bf16.mxu0 0
        %386 = vmatpush1.bf16.msra.mxu0 %v373
        %387 = vmatprep.subr.bf16.mxu0 0
        %388 = vmatpush1.bf16.msra.mxu0 0
        %389 = vmatprep.subr.bf16.mxu0 0
        %390 = vmatpush1.bf16.msra.mxu0 0
        %391 = vmatprep.subr.bf16.mxu0 0
        %392 = vmatpush1.bf16.msra.mxu0 0
        %393 = vmatprep.subr.bf16.mxu0 0
        %394 = vmatpush1.bf16.msra.mxu0 0
        %395 = vmatprep.subr.bf16.mxu0 0
        %396 = vmatpush1.bf16.msra.mxu0 0
        %397 = vmatprep.subr.bf16.mxu0 0
        %398 = vmatpush1.bf16.msra.mxu0 0
        %399 = vmatprep.subr.bf16.mxu0 0
        %400 = vmatpush1.bf16.msra.mxu0 0
        %401 = vmatprep.subr.bf16.mxu0 0
        %402 = vmatpush1.bf16.msra.mxu0 0
        %403 = vmatprep.subr.bf16.mxu0 0
        %404 = vmatpush1.bf16.msra.mxu0 0
        %405 = vmatprep.subr.bf16.mxu0 0
        %406 = vmatpush1.bf16.msra.mxu0 0
        %407 = vmatprep.subr.bf16.mxu0 0
        %408 = vmatpush1.bf16.msra.mxu0 0
        %409 = vmatprep.subr.bf16.mxu0 0
        %410 = vmatpush1.bf16.msra.mxu0 0
        %411 = vmatprep.subr.bf16.mxu0 0
        %412 = vmatpush1.bf16.msra.mxu0 0
        %413 = vmatprep.subr.bf16.mxu0 0
        %414 = vmatpush1.bf16.msra.mxu0 0
        %415 = vmatprep.mubr.bf16.mxu0 0
        %416 = vmatmul.mubr.bf16.gmra.mrb[0].mxu0 %v378
        %v417 = vpop.f32.mrb[0].mxu0
        %v418 = vadd.f32 %v337, %v417
        %v419 = vpop.f32.mrb[0].mxu0
        %v420 = vpop.f32.mrb[0].mxu0
        %v421 = vadd.f32 %v342, %v420
        %v422 = vpop.f32.mrb[0].mxu0
        %423 = vmatprep.mubr.bf16.mxu0 0
        %424 = vmatmul.mubr.bf16.gmra.mrb[0].mxu0 %v381
        %v425 = vpop.f32.mrb[0].mxu0
        %v426 = vadd.f32 %v347, %v425
        %v427 = vpop.f32.mrb[0].mxu0
        %v428 = vpop.f32.mrb[0].mxu0
        %v429 = vadd.f32 %v352, %v428
        %v430 = vpop.f32.mrb[0].mxu0
        %431 = vdwg.mxu0
        %v432 = vmax.f32 %v418, 0.0
        %v433 = vmax.f32 %v421, 0.0
        %v434 = vmax.f32 %v426, 0.0
        %v435 = vmax.f32 %v429, 0.0
        %v436 = vmin.f32 %v432, 6.0
        %v437 = vmin.f32 %v433, 6.0
        %v438 = vmin.f32 %v434, 6.0
        %v439 = vmin.f32 %v435, 6.0
        %v440 = vld [vmem:[%s314] sm:$0xff]
        %v441 = vld [vmem:[%s314 + $0x8] sm:$0xff]
        %v442 = vld [vmem:[%s314 + $0x10] sm:$0xff]
        %v443 = vld [vmem:[%s314 + $0x18] sm:$0xff]
        %v444 = vld [vmem:[%s314 + $0x20] sm:$0xff]
        %v445 = vld [vmem:[%s314 + $0x28] sm:$0xff]
        %v446 = vld [vmem:[%s314 + $0x30] sm:$0xff]
        %v447 = vld [vmem:[%s314 + $0x38] sm:$0xff]
        %v448 = vld [vmem:[%s314 + $0x40] sm:$0xff]
        %v449 = vld [vmem:[%s314 + $0x48] sm:$0xff]
        %v450 = vld [vmem:[%s314 + $0x50] sm:$0xff]
        %v451 = vld [vmem:[%s314 + $0x58] sm:$0xff]
        %v452 = vld [vmem:[%s314 + $0x60] sm:$0xff]
        %v453 = vld [vmem:[%s314 + $0x68] sm:$0xff]
        %v454 = vld [vmem:[%s314 + $0x70] sm:$0xff]
        %v455 = vld [vmem:[%s314 + $0x78] sm:$0xff]
        %456 = vmatprep.subr.mxu0 0.0
        %457 = vmatpush1.msra.mxu0 %v440
        %458 = vmatprep.subr.mxu0 0.0
        %459 = vmatpush1.msra.mxu0 %v441
        %460 = vmatprep.subr.mxu0 0.0
        %461 = vmatpush1.msra.mxu0 %v442
        %462 = vmatprep.subr.mxu0 0.0
        %463 = vmatpush1.msra.mxu0 %v443
        %464 = vmatprep.subr.mxu0 0.0
        %465 = vmatpush1.msra.mxu0 %v444
        %466 = vmatprep.subr.mxu0 0.0
        %467 = vmatpush1.msra.mxu0 %v445
        %468 = vmatprep.subr.mxu0 0.0
        %469 = vmatpush1.msra.mxu0 %v446
        %470 = vmatprep.subr.mxu0 0.0
        %471 = vmatpush1.msra.mxu0 %v447
        %472 = vmatprep.subr.mxu0 0.0
        %473 = vmatpush1.msra.mxu0 %v448
        %474 = vmatprep.subr.mxu0 0.0
        %475 = vmatpush1.msra.mxu0 %v449
        %476 = vmatprep.subr.mxu0 0.0
        %477 = vmatpush1.msra.mxu0 %v450
        %478 = vmatprep.subr.mxu0 0.0
        %479 = vmatpush1.msra.mxu0 %v451
        %480 = vmatprep.subr.mxu0 0.0
        %481 = vmatpush1.msra.mxu0 %v452
        %482 = vmatprep.subr.mxu0 0.0
        %483 = vmatpush1.msra.mxu0 %v453
        %484 = vmatprep.subr.mxu0 0.0
        %485 = vmatpush1.msra.mxu0 %v454
        %486 = vmatprep.subr.mxu0 0.0
        %487 = vmatpush1.msra.mxu0 %v455
        %488 = vmatprep.subr.mxu0 0.0
        %489 = vmatpush1.msra.mxu0 0.0
        %490 = vmatprep.subr.mxu0 0.0
        %491 = vmatpush1.msra.mxu0 0.0
        %492 = vmatprep.subr.mxu0 0.0
        %493 = vmatpush1.msra.mxu0 0.0
        %494 = vmatprep.subr.mxu0 0.0
        %495 = vmatpush1.msra.mxu0 0.0
        %496 = vmatprep.subr.mxu0 0.0
        %497 = vmatpush1.msra.mxu0 0.0
        %498 = vmatprep.subr.mxu0 0.0
        %499 = vmatpush1.msra.mxu0 0.0
        %500 = vmatprep.subr.mxu0 0.0
        %501 = vmatpush1.msra.mxu0 0.0
        %502 = vmatprep.subr.mxu0 0.0
        %503 = vmatpush1.msra.mxu0 0.0
        %504 = vmatprep.subr.mxu0 0.0
        %505 = vmatpush1.msra.mxu0 0.0
        %506 = vmatprep.subr.mxu0 0.0
        %507 = vmatpush1.msra.mxu0 0.0
        %508 = vmatprep.subr.mxu0 0.0
        %509 = vmatpush1.msra.mxu0 0.0
        %510 = vmatprep.subr.mxu0 0.0
        %511 = vmatpush1.msra.mxu0 0.0
        %512 = vmatprep.subr.mxu0 0.0
        %513 = vmatpush1.msra.mxu0 0.0
        %514 = vmatprep.subr.mxu0 0.0
        %515 = vmatpush1.msra.mxu0 0.0
        %516 = vmatprep.subr.mxu0 0.0
        %517 = vmatpush1.msra.mxu0 0.0
        %518 = vmatprep.subr.mxu0 0.0
        %519 = vmatpush1.msra.mxu0 0.0
        %520 = vmatprep.mubr.f32.mxu0 0.0
        %521 = vmatmul.mubr.f32.gmra.mrb[0].mxu0 %v436
        %v522 = vpop.f32.mrb[0].mxu0
        %v523 = vadd.f32 0.0, %v522
        %v524 = vpop.f32.mrb[0].mxu0
        %525 = vmatprep.mubr.f32.mxu0 0.0
        %526 = vmatmul.mubr.f32.gmra.mrb[0].mxu0 %v437
        %v527 = vpop.f32.mrb[0].mxu0
        %v528 = vadd.f32 0.0, %v527
        %v529 = vpop.f32.mrb[0].mxu0
        %530 = vmatprep.mubr.f32.mxu0 0.0
        %531 = vmatmul.mubr.f32.gmra.mrb[0].mxu0 %v438
        %v532 = vpop.f32.mrb[0].mxu0
        %v533 = vadd.f32 0.0, %v532
        %v534 = vpop.f32.mrb[0].mxu0
        %535 = vmatprep.mubr.f32.mxu0 0.0
        %536 = vmatmul.mubr.f32.gmra.mrb[0].mxu0 %v439
        %v537 = vpop.f32.mrb[0].mxu0
        %v538 = vadd.f32 0.0, %v537
        %v539 = vpop.f32.mrb[0].mxu0
        %540 = vdwg.mxu0
        %p541 = scmp.eq.s32.totalorder %s21, 0
        // Predicated region
        $region82: #{mobilenet_forward.1} parent=76 // pred_check
          %p542 = pneg %p541
        $region83: #{mobilenet_forward.1} parent=76 // pred_check_branch
          %544 = sbr.rel (%p542) target = $region85
        $region84: #{mobilenet_forward.1} parent=76 // pred_region
          %vm545 = vcmask 7168
          %546 = vst.msk [vmem:[#allocation2] sm:$0xff] %vm545, 0.0
          %547 = vst.msk [vmem:[#allocation2 + $0x8] sm:$0xff] %vm545, 0.0
          %548 = vst.msk [vmem:[#allocation2 + $0x10] sm:$0xff] %vm545, 0.0
          %549 = vst.msk [vmem:[#allocation2 + $0x18] sm:$0xff] %vm545, 0.0
        $region85: #{mobilenet_forward.1} parent=76 // pred_fallthru
          _
        %v550 = vld [vmem:[#allocation2] sm:$0xff]
        %v551 = vld [vmem:[#allocation2 + $0x8] sm:$0xff]
        %v552 = vld [vmem:[#allocation2 + $0x10] sm:$0xff]
        %v553 = vld [vmem:[#allocation2 + $0x18] sm:$0xff]
        %v554 = vadd.f32 %v550, %v523
        %v555 = vadd.f32 %v551, %v528
        %v556 = vadd.f32 %v552, %v533
        %v557 = vadd.f32 %v553, %v538
        %vm558 = vcmask 7168
        %559 = vst.msk [vmem:[#allocation2] sm:$0xff] %vm558, %v554
        %560 = vst.msk [vmem:[#allocation2 + $0x8] sm:$0xff] %vm558, %v555
        %561 = vst.msk [vmem:[#allocation2 + $0x10] sm:$0xff] %vm558, %v556
        %562 = vst.msk [vmem:[#allocation2 + $0x18] sm:$0xff] %vm558, %v557
        // Predicated region
        $region86: #{mobilenet_forward.1} parent=76 // pred_check
          %p563 = pneg %p541
        $region87: #{mobilenet_forward.1} parent=76 // pred_check_branch
          %565 = sbr.rel (%p563) target = $region89
        $region88: #{mobilenet_forward.1} parent=76 // pred_region
          %v566 = vld [vmem:[%s4] sm:$0x3]
          %v567 = vld [vmem:[#allocation2] sm:$0xff]
          %v568 = vld [vmem:[#allocation2 + $0x8] sm:$0xff]
          %v569 = vld [vmem:[#allocation2 + $0x10] sm:$0xff]
          %v570 = vld [vmem:[#allocation2 + $0x18] sm:$0xff]
          %v572 = vsel %vm376, %v566, 0
          %574 = vmatprep.subr.mxu0 0.0
          %575 = vmatpush1.msra.mxu0 %v567
          %576 = vmatprep.subr.mxu0 0.0
          %577 = vmatpush1.msra.mxu0 %v568
          %578 = vmatprep.subr.mxu0 0.0
          %579 = vmatpush1.msra.mxu0 %v569
          %580 = vmatprep.subr.mxu0 0.0
          %581 = vmatpush1.msra.mxu0 %v570
          %582 = vmatprep.subr.mxu0 0.0
          %583 = vmatpush1.msra.mxu0 0.0
          %584 = vmatprep.subr.mxu0 0.0
          %585 = vmatpush1.msra.mxu0 0.0
          %586 = vmatprep.subr.mxu0 0.0
          %587 = vmatpush1.msra.mxu0 0.0
          %588 = vmatprep.subr.mxu0 0.0
          %589 = vmatpush1.msra.mxu0 0.0
          %590 = vmatprep.subr.mxu0 0.0
          %591 = vmatpush1.msra.mxu0 0.0
          %592 = vmatprep.subr.mxu0 0.0
          %593 = vmatpush1.msra.mxu0 0.0
          %594 = vmatprep.subr.mxu0 0.0
          %595 = vmatpush1.msra.mxu0 0.0
          %596 = vmatprep.subr.mxu0 0.0
          %597 = vmatpush1.msra.mxu0 0.0
          %598 = vmatprep.subr.mxu0 0.0
          %599 = vmatpush1.msra.mxu0 0.0
          %600 = vmatprep.subr.mxu0 0.0
          %601 = vmatpush1.msra.mxu0 0.0
          %602 = vmatprep.subr.mxu0 0.0
          %603 = vmatpush1.msra.mxu0 0.0
          %604 = vmatprep.subr.mxu0 0.0
          %605 = vmatpush1.msra.mxu0 0.0
          %606 = vmatprep.subr.mxu0 0.0
          %607 = vmatpush1.msra.mxu0 0.0
          %608 = vmatprep.subr.mxu0 0.0
          %609 = vmatpush1.msra.mxu0 0.0
          %610 = vmatprep.subr.mxu0 0.0
          %611 = vmatpush1.msra.mxu0 0.0
          %612 = vmatprep.subr.mxu0 0.0
          %613 = vmatpush1.msra.mxu0 0.0
          %614 = vmatprep.subr.mxu0 0.0
          %615 = vmatpush1.msra.mxu0 0.0
          %616 = vmatprep.subr.mxu0 0.0
          %617 = vmatpush1.msra.mxu0 0.0
          %618 = vmatprep.subr.mxu0 0.0
          %619 = vmatpush1.msra.mxu0 0.0
          %620 = vmatprep.subr.mxu0 0.0
          %621 = vmatpush1.msra.mxu0 0.0
          %622 = vmatprep.subr.mxu0 0.0
          %623 = vmatpush1.msra.mxu0 0.0
          %624 = vmatprep.subr.mxu0 0.0
          %625 = vmatpush1.msra.mxu0 0.0
          %626 = vmatprep.subr.mxu0 0.0
          %627 = vmatpush1.msra.mxu0 0.0
          %628 = vmatprep.subr.mxu0 0.0
          %629 = vmatpush1.msra.mxu0 0.0
          %630 = vmatprep.subr.mxu0 0.0
          %631 = vmatpush1.msra.mxu0 0.0
          %632 = vmatprep.subr.mxu0 0.0
          %633 = vmatpush1.msra.mxu0 0.0
          %634 = vmatprep.subr.mxu0 0.0
          %635 = vmatpush1.msra.mxu0 0.0
          %636 = vmatprep.subr.mxu0 0.0
          %637 = vmatpush1.msra.mxu0 0.0
          %638 = vmatprep.mubr.f32.mxu0 0.0
          %639 = vmatmul.mubr.f32.gmra.mrb[0].mxu0 %v572
          %v640 = vpop.f32.mrb[0].mxu0
          %v641 = vadd.f32 0.0, %v640
          %v642 = vpop.f32.mrb[0].mxu0
          %643 = vdwg.mxu0
          %vm644 = vcmask 1024
          %645 = vst.msk [vmem:[%s320] sm:$0x3] %vm644, %v641
        $region89: #{mobilenet_forward.1} parent=76 // pred_fallthru
          _
        %p646 = scmp.lt.s32.totalorder %s20, 1
        %s647 = scalar_select %p646, %s20, 1
        %s648 = smul.addr %s647, 2
        %s649 = scalar_lea.vmem %s5, %s648
        // Predicated region
        $region90: #{mobilenet_forward.1} parent=76 // pred_check
          %p650 = pneg %p165
        $region91: #{mobilenet_forward.1} parent=76 // pred_check_branch
          %652 = sbr.rel (%p650) target = $region93
        $region92: #{mobilenet_forward.1} parent=76 // pred_region
          _
        $region93: #{mobilenet_forward.1} parent=76 // pred_fallthru
          _
      $region77: #{mobilenet_forward.1} parent=5 // pred_fallthru
        _
      %p653 = scmp.le.s32.totalorder 2, %s11
      // Predicated region
      $region94: #{mobilenet_forward.1} parent=5 // pred_check
        %p654 = pneg %p653
      $region95: #{mobilenet_forward.1} parent=5 // pred_check_branch
        %656 = sbr.rel (%p654) target = $region97
      $region96: #{mobilenet_forward.1} parent=5 // pred_region
        %s657 = ssub.s32 %s11, 2
        // Predicated region
        $region98: #{mobilenet_forward.1} parent=96 // pred_check
          %p658 = pneg %p171
        $region99: #{mobilenet_forward.1} parent=96 // pred_check_branch
          %660 = sbr.rel (%p658) target = $region101
        $region100: #{mobilenet_forward.1} parent=96 // pred_region
          %p661 = scmp.lt.s32.totalorder %s22, 1
          %s662 = scalar_select %p661, %s22, 1
          %s663 = smul.addr %s662, 2
          %s664 = scalar_lea.vmem %s5, %s663
        $region101: #{mobilenet_forward.1} parent=96 // pred_fallthru
          _
      $region97: #{mobilenet_forward.1} parent=5 // pred_fallthru
        _
    $region6: #{mobilenet_forward.1} parent=1 // loop_footer
      %s15 = sadd.s32 1, %s11
    $region7: #{mobilenet_forward.1} parent=1 // loop_footer_branch
      %10 = sbr.rel target = $region3
    $region8: #{mobilenet_forward.1} parent=1 // loop_exit
      _

</llo_original>
